<compile_context>
chip_gen: v5e
topology: v5e:2x2
jax: 0.10.0
libtpu: 0.0.40
codegen_flags: <defaults>
</compile_context>

<pallas_src>
import functools
import math

import jax
import jax.numpy as jnp
from jax import lax
from jax.experimental import pallas as pl
from jax.experimental.pallas import tpu as pltpu


def _elementwise_channel_kernel(x_ref, wb_ref, out_ref, dlog_ref, *,
                                c, rb, tp, width, permute):
    # x_ref   : (RB, TP) f32   rows of the (N*C, H*W) view (batch-major channel rows)
    # wb_ref  : (2C-1, RB, 1)  banded 1x1-conv weights: wb[k, r, 0] = w[r%C, r%C + k-(C-1)] or 0
    # out_ref : (RB, TP) f32
    # dlog_ref: (RB, LW) f32   lane-resident logdet partial for this tile (LW = 128 or TP)
    pi = pl.program_id(1)

    x = x_ref[...]                                            # (RB, TP)
    wb = wb_ref[...]                                          # (2C-1, RB, 1)

    # ---- checkerboard mask: spatial parity (1,TP) XOR channel parity (RB,1) ----
    lane = lax.broadcasted_iota(jnp.int32, (1, tp), 1) + pi * tp
    if (width & (width - 1)) == 0:                            # power-of-two width: shift/and
        shift = width.bit_length() - 1
        h_i = lane >> shift
        w_i = lane & (width - 1)
    else:
        h_i = lane // width
        w_i = lane - h_i * width
    sp = (h_i + w_i) & 1                                      # (1, TP)

    row = lax.broadcasted_iota(jnp.int32, (rb, 1), 0)         # block rows are C-aligned
    if (c & (c - 1)) == 0:
        cpar = (row & (c - 1)) & 1
    else:
        cpar = (row % c) & 1                                  # (RB, 1)

    target = 1 if permute else 0
    mask_one = (sp ^ cpar) == target                          # (RB, TP) bool, True where mask==1

    # ---- masked input and banded 1x1 conv over channels (sublane rolls + full-vreg FMAs) ----
    xm = jnp.where(mask_one, x, 0.0)
    pre = xm * wb[c - 1]                                      # d = 0 band (no roll)
    for k in range(2 * c - 1):
        d = k - (c - 1)
        if d == 0:
            continue
        rolled = pltpu.roll(xm, shift=(-d) % rb, axis=0)      # rolled[r] = xm[(r + d) % RB]
        pre = pre + rolled * wb[k]                            # out-of-group terms have 0 weight

    # ---- sigmoid / log-sigmoid sharing a single exp ----
    e = jnp.exp(-pre)
    sig = 1.0 / (1.0 + e)                                     # sigmoid(pre)
    log_sig = -jnp.log1p(e)                                   # log(sigmoid(pre)); sig > 0

    # ---- coupling output: z where mask==1, z*sigmoid(conv(z*mask)) where mask==0 ----
    out_ref[...] = jnp.where(mask_one, x, x * sig)

    # ---- logdet contribution (mask==0 positions), reduced only across 128-lane chunks ----
    contrib = jnp.where(mask_one, 0.0, log_sig)               # (RB, TP)
    if tp % 128 == 0:
        acc = contrib[:, 0:128]
        for j in range(1, tp // 128):
            acc = acc + contrib[:, j * 128:(j + 1) * 128]     # pure VALU, 128-aligned slices
    else:
        acc = contrib
    dlog_ref[...] = acc


def _lcm(a, b):
    return a * b // math.gcd(a, b)


def _choose_row_block(r, c):
    """Largest divisor of r that is a multiple of lcm(c, 8), capped at 64 rows."""
    base = _lcm(c, 8)
    best = None
    cand = base
    while cand <= min(r, 64):
        if r % cand == 0:
            best = cand
        cand += base
    return best if best is not None else r      # full row extent is always a legal block


def _choose_spatial_tile(p, rb):
    """Largest 128-multiple divisor of p with ~1 MiB per input block."""
    if p % 128 != 0:
        return p
    cap = max(128, (1 << 20) // (4 * rb))
    best = 128
    tp = 128
    while tp <= min(p, cap):
        if p % tp == 0:
            best = tp
        tp += 128
    return best


@functools.partial(jax.jit, static_argnames=("permute",))
def elementwise_channel_forward(z, weight, logdet=0.0, permute=False):
    """Forward (reverse=False) pass of Elementwise_channel.

    z: (N, C, H, W) float32 (NCHW, as in PyTorch), weight: (C, C, 1, 1) float32.
    Returns (out_final (N, C, H, W), logdet (N,)).
    """
    n, c, h, w = z.shape
    p = h * w
    r = n * c

    rb = _choose_row_block(r, c)
    tp = _choose_spatial_tile(p, rb)
    lw = 128 if tp % 128 == 0 else tp
    n_pt = p // tp

    x2d = z.reshape(r, p)                       # free view of contiguous NCHW
    w2d = weight[:, :, 0, 0]                    # (C_out, C_in)

    # Banded weights: wbands[k, row, 0] = w[row%C, row%C + (k - (C-1))], zero outside [0, C).
    o = jnp.arange(c)[:, None]                  # (C, 1) output channel within a group
    d = jnp.arange(-(c - 1), c)[None, :]        # (1, 2C-1) sublane offsets
    ci = o + d
    band_core = jnp.where((ci >= 0) & (ci < c),
                          w2d[o, jnp.clip(ci, 0, c - 1)], 0.0)       # (C, 2C-1)
    wbands = jnp.tile(band_core, (rb // c, 1)).T[:, :, None]         # (2C-1, RB, 1)

    kernel = functools.partial(_elementwise_channel_kernel,
                               c=c, rb=rb, tp=tp, width=w, permute=bool(permute))

    out2d, dlog_parts = pl.pallas_call(
        kernel,
        grid=(r // rb, n_pt),
        in_specs=[
            pl.BlockSpec((rb, tp), lambda ri, pi: (ri, pi)),
            pl.BlockSpec((2 * c - 1, rb, 1), lambda ri, pi: (0, 0, 0)),
        ],
        out_specs=(
            pl.BlockSpec((rb, tp), lambda ri, pi: (ri, pi)),
            pl.BlockSpec((None, rb, lw), lambda ri, pi: (pi, ri, 0)),
        ),
        out_shape=(
            jax.ShapeDtypeStruct((r, p), jnp.float32),
            jax.ShapeDtypeStruct((n_pt, r, lw), jnp.float32),
        ),
        compiler_params=pltpu.CompilerParams(
            dimension_semantics=("parallel", "parallel"),
            vmem_limit_bytes=32 * 1024 * 1024,
        ),
    )(x2d, wbands)

    out_final = out2d.reshape(n, c, h, w)
    dlog = dlog_parts.reshape(n_pt, n, c, lw).sum(axis=(0, 2, 3))   # tiny final reduce in XLA
    return out_final, logdet + dlog

# TODO(synk): reverse=True branch (inverse coupling) not implemented; only the default forward path.


def checkerboard_mask(c, h, w):
    # 1 - (c + h + w) % 2 over shape (C, H, W) == torch checkerboard(z[0].shape)
    ci = jnp.arange(c)[:, None, None]
    hi = jnp.arange(h)[None, :, None]
    wi = jnp.arange(w)[None, None, :]
    return (1 - (ci + hi + wi) % 2).astype(jnp.float32)


def _reference_forward(z, weight, permute=False):
    """Pure-JAX reference mirroring the PyTorch forward (reverse=False)."""
    n, c, h, w = z.shape
    mask = checkerboard_mask(c, h, w)
    if permute:
        mask = 1.0 - mask
    wm = weight[:, :, 0, 0]
    out = jax.nn.sigmoid(jnp.einsum("nchw,oc->nohw", z * mask[None], wm))
    inv = 1.0 - mask[None]
    out_final = z * inv * out + z * mask[None]
    dlog = jnp.sum(inv * jnp.log(jnp.abs(out)), axis=(1, 2, 3))
    return out_final, dlog


if __name__ == "__main__":
    key = jax.random.PRNGKey(0)
    k1, k2 = jax.random.split(key)
    N, C, H, W = 2, 4, 16, 16

    z = jax.random.normal(k1, (N, C, H, W), dtype=jnp.float32)
    # deterministic stand-in for np.random.randn(C, C, 1, 1) weight init
    weight = jax.random.normal(k2, (C, C, 1, 1), dtype=jnp.float32)

    for permute in (False, True):
        out_final, logdet = elementwise_channel_forward(z, weight, permute=permute)
        jax.block_until_ready((out_final, logdet))

        ref_out, ref_dlog = _reference_forward(z, weight, permute=permute)
        assert jnp.allclose(out_final, ref_out, atol=1e-5, rtol=1e-5), "out mismatch"
        assert jnp.allclose(logdet, ref_dlog, atol=1e-4, rtol=1e-4), "logdet mismatch"

    print("KERNEL_OK")
</pallas_src>

<mosaic_0001>
module attributes {stable_mosaic.version = 11 : i64} {
  func.func @_elementwise_channel_kernel(%arg0: i32, %arg1: i32, %arg2: memref<8x256xf32, #tpu.memory_space<vmem>>, %arg3: memref<7x8x1xf32, #tpu.memory_space<vmem>>, %arg4: memref<8x256xf32, #tpu.memory_space<vmem>>, %arg5: memref<1x8x128xf32, #tpu.memory_space<vmem>>) attributes {dimension_semantics = [#tpu.dimension_semantics<parallel>, #tpu.dimension_semantics<parallel>], iteration_bounds = array<i64: 1, 1>, scalar_prefetch = 0 : i64, scratch_operands = 0 : i64, tpu.core_type = #tpu.core_type<tc>, window_params = [{transform_indices = @transform_0, window_bounds = array<i64: 8, 256>}, {pipeline_mode = #tpu.pipeline_mode<synchronous>, transform_indices = @transform_1, window_bounds = array<i64: 7, 8, 1>}, {transform_indices = @transform_2, window_bounds = array<i64: 8, 256>}, {transform_indices = @transform_3, window_bounds = array<i64: 1, 8, 128>}]} {
    %c0 = arith.constant 0 : index
    %c0_0 = arith.constant 0 : index
    %0 = vector.load %arg2[%c0, %c0_0] : memref<8x256xf32, #tpu.memory_space<vmem>>, vector<8x256xf32>
    %c0_1 = arith.constant 0 : index
    %c0_2 = arith.constant 0 : index
    %c0_3 = arith.constant 0 : index
    %1 = vector.load %arg3[%c0_1, %c0_2, %c0_3] : memref<7x8x1xf32, #tpu.memory_space<vmem>>, vector<7x8x1xf32>
    %2 = tpu.iota {dimensions = array<i32: 1>} : vector<1x256xi32>
    %c256_i32 = arith.constant 256 : i32
    %3 = arith.muli %arg1, %c256_i32 : i32
    %4 = vector.broadcast %3 : i32 to vector<1x256xi32>
    %5 = arith.addi %2, %4 : vector<1x256xi32>
    %c4_i32 = arith.constant 4 : i32
    %6 = vector.broadcast %c4_i32 : i32 to vector<1x256xi32>
    %7 = arith.shrsi %5, %6 : vector<1x256xi32>
    %c15_i32 = arith.constant 15 : i32
    %8 = vector.broadcast %c15_i32 : i32 to vector<1x256xi32>
    %9 = arith.andi %5, %8 : vector<1x256xi32>
    %10 = arith.addi %7, %9 : vector<1x256xi32>
    %c1_i32 = arith.constant 1 : i32
    %11 = vector.broadcast %c1_i32 : i32 to vector<1x256xi32>
    %12 = arith.andi %10, %11 : vector<1x256xi32>
    %13 = tpu.iota {dimensions = array<i32: 0>} : vector<8x1xi32>
    %c3_i32 = arith.constant 3 : i32
    %14 = vector.broadcast %c3_i32 : i32 to vector<8x1xi32>
    %15 = arith.andi %13, %14 : vector<8x1xi32>
    %c1_i32_4 = arith.constant 1 : i32
    %16 = vector.broadcast %c1_i32_4 : i32 to vector<8x1xi32>
    %17 = arith.andi %15, %16 : vector<8x1xi32>
    %18 = vector.broadcast %12 : vector<1x256xi32> to vector<8x256xi32>
    %19 = vector.broadcast %17 : vector<8x1xi32> to vector<8x256xi32>
    %20 = arith.xori %18, %19 : vector<8x256xi32>
    %c0_i32 = arith.constant 0 : i32
    %21 = vector.broadcast %c0_i32 : i32 to vector<8x256xi32>
    %22 = arith.cmpi eq, %20, %21 : vector<8x256xi32>
    %cst = arith.constant 0.000000e+00 : f32
    %23 = vector.broadcast %cst : f32 to vector<8x256xf32>
    %24 = arith.select %22, %0, %23 : vector<8x256xi1>, vector<8x256xf32>
    %25 = vector.extract_strided_slice %1 {offsets = [3, 0, 0], sizes = [1, 8, 1], strides = [1, 1, 1]} : vector<7x8x1xf32> to vector<1x8x1xf32>
    %26 = vector.shape_cast %25 : vector<1x8x1xf32> to vector<8x1xf32>
    %27 = vector.broadcast %26 : vector<8x1xf32> to vector<8x256xf32>
    %28 = arith.mulf %24, %27 : vector<8x256xf32>
    %c3_i32_5 = arith.constant 3 : i32
    %29 = tpu.dynamic_rotate %24 by %c3_i32_5 dim 0 : vector<8x256xf32>, i32 -> vector<8x256xf32>
    %30 = vector.extract_strided_slice %1 {offsets = [0, 0, 0], sizes = [1, 8, 1], strides = [1, 1, 1]} : vector<7x8x1xf32> to vector<1x8x1xf32>
    %31 = vector.shape_cast %30 : vector<1x8x1xf32> to vector<8x1xf32>
    %32 = vector.broadcast %31 : vector<8x1xf32> to vector<8x256xf32>
    %33 = arith.mulf %29, %32 : vector<8x256xf32>
    %34 = arith.addf %28, %33 : vector<8x256xf32>
    %c2_i32 = arith.constant 2 : i32
    %35 = tpu.dynamic_rotate %24 by %c2_i32 dim 0 : vector<8x256xf32>, i32 -> vector<8x256xf32>
    %36 = vector.extract_strided_slice %1 {offsets = [1, 0, 0], sizes = [1, 8, 1], strides = [1, 1, 1]} : vector<7x8x1xf32> to vector<1x8x1xf32>
    %37 = vector.shape_cast %36 : vector<1x8x1xf32> to vector<8x1xf32>
    %38 = vector.broadcast %37 : vector<8x1xf32> to vector<8x256xf32>
    %39 = arith.mulf %35, %38 : vector<8x256xf32>
    %40 = arith.addf %34, %39 : vector<8x256xf32>
    %c1_i32_6 = arith.constant 1 : i32
    %41 = tpu.dynamic_rotate %24 by %c1_i32_6 dim 0 : vector<8x256xf32>, i32 -> vector<8x256xf32>
    %42 = vector.extract_strided_slice %1 {offsets = [2, 0, 0], sizes = [1, 8, 1], strides = [1, 1, 1]} : vector<7x8x1xf32> to vector<1x8x1xf32>
    %43 = vector.shape_cast %42 : vector<1x8x1xf32> to vector<8x1xf32>
    %44 = vector.broadcast %43 : vector<8x1xf32> to vector<8x256xf32>
    %45 = arith.mulf %41, %44 : vector<8x256xf32>
    %46 = arith.addf %40, %45 : vector<8x256xf32>
    %c7_i32 = arith.constant 7 : i32
    %47 = tpu.dynamic_rotate %24 by %c7_i32 dim 0 : vector<8x256xf32>, i32 -> vector<8x256xf32>
    %48 = vector.extract_strided_slice %1 {offsets = [4, 0, 0], sizes = [1, 8, 1], strides = [1, 1, 1]} : vector<7x8x1xf32> to vector<1x8x1xf32>
    %49 = vector.shape_cast %48 : vector<1x8x1xf32> to vector<8x1xf32>
    %50 = vector.broadcast %49 : vector<8x1xf32> to vector<8x256xf32>
    %51 = arith.mulf %47, %50 : vector<8x256xf32>
    %52 = arith.addf %46, %51 : vector<8x256xf32>
    %c6_i32 = arith.constant 6 : i32
    %53 = tpu.dynamic_rotate %24 by %c6_i32 dim 0 : vector<8x256xf32>, i32 -> vector<8x256xf32>
    %54 = vector.extract_strided_slice %1 {offsets = [5, 0, 0], sizes = [1, 8, 1], strides = [1, 1, 1]} : vector<7x8x1xf32> to vector<1x8x1xf32>
    %55 = vector.shape_cast %54 : vector<1x8x1xf32> to vector<8x1xf32>
    %56 = vector.broadcast %55 : vector<8x1xf32> to vector<8x256xf32>
    %57 = arith.mulf %53, %56 : vector<8x256xf32>
    %58 = arith.addf %52, %57 : vector<8x256xf32>
    %c5_i32 = arith.constant 5 : i32
    %59 = tpu.dynamic_rotate %24 by %c5_i32 dim 0 : vector<8x256xf32>, i32 -> vector<8x256xf32>
    %60 = vector.extract_strided_slice %1 {offsets = [6, 0, 0], sizes = [1, 8, 1], strides = [1, 1, 1]} : vector<7x8x1xf32> to vector<1x8x1xf32>
    %61 = vector.shape_cast %60 : vector<1x8x1xf32> to vector<8x1xf32>
    %62 = vector.broadcast %61 : vector<8x1xf32> to vector<8x256xf32>
    %63 = arith.mulf %59, %62 : vector<8x256xf32>
    %64 = arith.addf %58, %63 : vector<8x256xf32>
    %cst_7 = arith.constant 0.000000e+00 : f32
    %65 = vector.broadcast %cst_7 : f32 to vector<8x256xf32>
    %66 = arith.subf %65, %64 : vector<8x256xf32>
    %67 = math.exp %66 : vector<8x256xf32>
    %cst_8 = arith.constant 1.000000e+00 : f32
    %68 = vector.broadcast %cst_8 : f32 to vector<8x256xf32>
    %69 = arith.addf %68, %67 : vector<8x256xf32>
    %cst_9 = arith.constant 1.000000e+00 : f32
    %70 = vector.broadcast %cst_9 : f32 to vector<8x256xf32>
    %71 = arith.divf %70, %69 : vector<8x256xf32>
    %72 = math.log1p %67 : vector<8x256xf32>
    %cst_10 = arith.constant 0.000000e+00 : f32
    %73 = vector.broadcast %cst_10 : f32 to vector<8x256xf32>
    %74 = arith.subf %73, %72 : vector<8x256xf32>
    %75 = arith.mulf %0, %71 : vector<8x256xf32>
    %76 = arith.select %22, %0, %75 : vector<8x256xi1>, vector<8x256xf32>
    %c0_11 = arith.constant 0 : index
    %c0_12 = arith.constant 0 : index
    %77 = vector.load %arg4[%c0_11, %c0_12] : memref<8x256xf32, #tpu.memory_space<vmem>>, vector<8x256xf32>
    tpu.vector_store %arg4[%c0_11, %c0_12], %76 {strides = array<i32>} : memref<8x256xf32, #tpu.memory_space<vmem>>, vector<8x256xf32>,
    %cst_13 = arith.constant 0.000000e+00 : f32
    %78 = vector.broadcast %cst_13 : f32 to vector<8x256xf32>
    %79 = arith.select %22, %78, %74 : vector<8x256xi1>, vector<8x256xf32>
    %80 = vector.extract_strided_slice %79 {offsets = [0, 0], sizes = [8, 128], strides = [1, 1]} : vector<8x256xf32> to vector<8x128xf32>
    %81 = vector.extract_strided_slice %79 {offsets = [0, 128], sizes = [8, 128], strides = [1, 1]} : vector<8x256xf32> to vector<8x128xf32>
    %82 = arith.addf %80, %81 : vector<8x128xf32>
    %c0_14 = arith.constant 0 : index
    %c0_15 = arith.constant 0 : index
    %c0_16 = arith.constant 0 : index
    %83 = vector.load %arg5[%c0_14, %c0_15, %c0_16] : memref<1x8x128xf32, #tpu.memory_space<vmem>>, vector<1x8x128xf32>
    %84 = vector.shape_cast %83 : vector<1x8x128xf32> to vector<8x128xf32>
    %85 = vector.shape_cast %82 : vector<8x128xf32> to vector<1x8x128xf32>
    tpu.vector_store %arg5[%c0_14, %c0_15, %c0_16], %85 {strides = array<i32>} : memref<1x8x128xf32, #tpu.memory_space<vmem>>, vector<1x8x128xf32>,
    return
  }
  func.func @transform_0(%arg0: i32, %arg1: i32) -> (i32, i32) {
    %c0_i32 = arith.constant 0 : i32
    return %arg0, %arg1 : i32, i32
  }
  func.func @transform_1(%arg0: i32, %arg1: i32) -> (i32, i32, i32) {
    %c0_i32 = arith.constant 0 : i32
    %c0_i32_0 = arith.constant 0 : i32
    %c0_i32_1 = arith.constant 0 : i32
    %c0_i32_2 = arith.constant 0 : i32
    return %c0_i32, %c0_i32_0, %c0_i32_1 : i32, i32, i32
  }
  func.func @transform_2(%arg0: i32, %arg1: i32) -> (i32, i32) {
    %c0_i32 = arith.constant 0 : i32
    return %arg0, %arg1 : i32, i32
  }
  func.func @transform_3(%arg0: i32, %arg1: i32) -> (i32, i32, i32) {
    %c0_i32 = arith.constant 0 : i32
    %c0_i32_0 = arith.constant 0 : i32
    return %arg1, %arg0, %c0_i32 : i32, i32, i32
  }
}

</mosaic_0001>

<llo_original>
// kernel: elementwise_channel_forward.1
$region0: #{elementwise_channel_forward.1}
  #allocation0 [shape = 'u32[]', space=smem, size = 0x4, offset = 0x4, fixed_abs, tag = 'smem constant byte address 0x4 - core index']
  #allocation1 [shape = 'u32[72,128]{1,0:T(1,128)}', space=vmem, size = 0x9000, scoped, tag = 'internal scratch']
  %s0 = inlined_call_operand.vmem [shape: f32[8,256], index: 0, kind: input, shape index: {}]
  %s1 = inlined_call_operand.vmem [shape: f32[7,8,1], index: 1, kind: input, shape index: {}]
  %s2 = inlined_call_operand.vmem [shape: f32[8,256], index: 2, kind: output, shape index: {0}]
  %s3 = inlined_call_operand.vmem [shape: f32[1,8,128], index: 3, kind: output, shape index: {1}]
  %4 = xla_tuple %s2, %s3
  %s5 = sld [smem:[#allocation0]]
  $region26: #{elementwise_channel_forward.1} parent=0
    _
  %s7 = ssub.s32 1, %s5
  %s8 = scalar_select 0, %s7, %s5
  // Predicated region
  $region2: #{elementwise_channel_forward.1} parent=0 // pred_check
    _
  $region3: #{elementwise_channel_forward.1} parent=0 // pred_check_branch
    %10 = sbr.rel (0) target = $region5
  $region4: #{elementwise_channel_forward.1} parent=0 // pred_region
    _
  $region5: #{elementwise_channel_forward.1} parent=0 // pred_fallthru
    _
  // Predicated region
  $region6: #{elementwise_channel_forward.1} parent=0 // pred_check
    _
  $region7: #{elementwise_channel_forward.1} parent=0 // pred_check_branch
    %12 = sbr.rel (0) target = $region9
  $region8: #{elementwise_channel_forward.1} parent=0 // pred_region
    _
  $region9: #{elementwise_channel_forward.1} parent=0 // pred_fallthru
    _
  %v13 = vld [vmem:[%s0] sm:$0xff]
  %v14 = vld [vmem:[%s0 + $0x8] sm:$0xff]
  %v15 = vld [vmem:[%s1] sm:$0xff]
  %v16 = vld [vmem:[%s1 + $0x8] sm:$0xff]
  %v17 = vld [vmem:[%s1 + $0x10] sm:$0xff]
  %v18 = vld [vmem:[%s1 + $0x18] sm:$0xff]
  %v19 = vld [vmem:[%s1 + $0x20] sm:$0xff]
  %v20 = vld [vmem:[%s1 + $0x28] sm:$0xff]
  %v21 = vld [vmem:[%s1 + $0x30] sm:$0xff]
  %v22 = vlaneseq
  %v23 = vand.u32 %v22, 127
  %v24 = vadd.s32 %v23, 128
  %s25 = smul.u32 0, 256
  %v26 = vstv %s25
  %v27 = vadd.s32 %v23, %v26
  %v28 = vadd.s32 %v24, %v26
  %v29 = vshra.s32 %v27, 4
  %v30 = vshra.s32 %v28, 4
  %v31 = vand.u32 %v27, 15
  %v32 = vand.u32 %v28, 15
  %v33 = vadd.s32 %v29, %v31
  %v34 = vadd.s32 %v30, %v32
  %v35 = vand.u32 %v33, 1
  %v36 = vand.u32 %v34, 1
  %v37 = vlaneseq
  %v38 = vshrl.u32 %v37, 7
  %v39 = vand.u32 %v38, 3
  %v40 = vand.u32 %v39, 1
  %v41 = vxor.u32 %v35, %v40
  %v42 = vxor.u32 %v36, %v40
  %vm43 = vcmp.eq.s32.totalorder %v41, 0
  %vm44 = vcmp.eq.s32.totalorder %v42, 0
  %v45 = vsel %vm43, %v13, 0.0
  %v46 = vsel %vm44, %v14, 0.0
  %48 = vset.pattern.permute.xlu0 0
  %49 = vperm.xlu0 %48, %v18
  %v50 = vpop.permute.xlu0 %49
  %v52 = vmul.f32 %v45, %v50
  %v53 = vmul.f32 %v46, %v50
  %v54 = vrot.slane %v45, 5
  %v55 = vrot.slane %v46, 5
  %57 = vset.pattern.permute.xlu0 0
  %58 = vperm.xlu0 %57, %v15
  %v59 = vpop.permute.xlu0 %58
  %v61 = vmul.f32 %v54, %v59
  %v62 = vmul.f32 %v55, %v59
  %v63 = vadd.f32 %v52, %v61
  %v64 = vadd.f32 %v53, %v62
  %v65 = vrot.slane %v45, 6
  %v66 = vrot.slane %v46, 6
  %68 = vset.pattern.permute.xlu0 0
  %69 = vperm.xlu0 %68, %v16
  %v70 = vpop.permute.xlu0 %69
  %v72 = vmul.f32 %v65, %v70
  %v73 = vmul.f32 %v66, %v70
  %v74 = vadd.f32 %v63, %v72
  %v75 = vadd.f32 %v64, %v73
  %v76 = vrot.slane %v45, 7
  %v77 = vrot.slane %v46, 7
  %79 = vset.pattern.permute.xlu0 0
  %80 = vperm.xlu0 %79, %v17
  %v81 = vpop.permute.xlu0 %80
  %v83 = vmul.f32 %v76, %v81
  %v84 = vmul.f32 %v77, %v81
  %v85 = vadd.f32 %v74, %v83
  %v86 = vadd.f32 %v75, %v84
  %v87 = vrot.slane %v45, 1
  %v88 = vrot.slane %v46, 1
  %90 = vset.pattern.permute.xlu0 0
  %91 = vperm.xlu0 %90, %v19
  %v92 = vpop.permute.xlu0 %91
  %v94 = vmul.f32 %v87, %v92
  %v95 = vmul.f32 %v88, %v92
  %v96 = vadd.f32 %v85, %v94
  %v97 = vadd.f32 %v86, %v95
  %v98 = vrot.slane %v45, 2
  %v99 = vrot.slane %v46, 2
  %101 = vset.pattern.permute.xlu0 0
  %102 = vperm.xlu0 %101, %v20
  %v103 = vpop.permute.xlu0 %102
  %v105 = vmul.f32 %v98, %v103
  %v106 = vmul.f32 %v99, %v103
  %v107 = vadd.f32 %v96, %v105
  %v108 = vadd.f32 %v97, %v106
  %v109 = vrot.slane %v45, 3
  %v110 = vrot.slane %v46, 3
  %112 = vset.pattern.permute.xlu0 0
  %113 = vperm.xlu0 %112, %v21
  %v114 = vpop.permute.xlu0 %113
  %v116 = vmul.f32 %v109, %v114
  %v117 = vmul.f32 %v110, %v114
  %v118 = vadd.f32 %v107, %v116
  %v119 = vadd.f32 %v108, %v117
  %v120 = vsub.f32 0.0, %v118
  %v121 = vsub.f32 0.0, %v119
  %v122 = vmul.f32 %v120, 1.442695
  %v123 = vpow.pop %v122
  %v124 = vmul.f32 %v121, 1.442695
  %v125 = vpow.pop %v124
  %v126 = vadd.f32 %v123, 1.0
  %v127 = vadd.f32 %v125, 1.0
  %v128 = vrcp.pop %v126
  %v129 = vmul.f32 %v126, %v128
  %v130 = vsub.f32 1.0, %v129
  %v131 = vmul.f32 %v128, %v130
  %v132 = vadd.f32 %v128, %v131
  %vm133 = vweird.f32 %v126
  %vm134 = vweird.f32 %v128
  %vm135 = vmor %vm133, %vm134
  %v136 = vsel %vm135, %v128, %v132
  %v137 = vand.u32 2147483647, %v126
  %vm138 = vcmp.eq.f32.partialorder %v137, 8.507059e+37
  %v139 = vand.u32 %v126, 2147483648
  %v140 = vor.u32 1.1754944e-38, %v139
  %v141 = vsel %vm138, %v140, %v136
  %v142 = vmul.f32 1.0, %v141
  %v143 = vrcp.pop %v127
  %v144 = vmul.f32 %v127, %v143
  %v145 = vsub.f32 1.0, %v144
  %v146 = vmul.f32 %v143, %v145
  %v147 = vadd.f32 %v143, %v146
  %vm148 = vweird.f32 %v127
  %vm149 = vweird.f32 %v143
  %vm150 = vmor %vm148, %vm149
  %v151 = vsel %vm150, %v143, %v147
  %v152 = vand.u32 2147483647, %v127
  %vm153 = vcmp.eq.f32.partialorder %v152, 8.507059e+37
  %v154 = vand.u32 %v127, 2147483648
  %v155 = vor.u32 1.1754944e-38, %v154
  %v156 = vsel %vm153, %v155, %v151
  %v157 = vmul.f32 1.0, %v156
  %v158 = vadd.f32 %v123, 1.0
  %v159 = vlog2.pop %v158
  %v160 = vmul.f32 %v159, 0.6931472
  %v161 = vmul.f32 -0.5, %v123
  %v162 = vadd.f32 %v161, 1.0
  %v163 = vmul.f32 %v162, %v123
  %v164 = vand.u32 2147483647, %v123
  %vm165 = vcmp.lt.f32.partialorder %v164, 0.0004427343
  %v166 = vsel %vm165, %v163, %v160
  %v167 = vadd.f32 %v125, 1.0
  %v168 = vlog2.pop %v167
  %v169 = vmul.f32 %v168, 0.6931472
  %v170 = vmul.f32 -0.5, %v125
  %v171 = vadd.f32 %v170, 1.0
  %v172 = vmul.f32 %v171, %v125
  %v173 = vand.u32 2147483647, %v125
  %vm174 = vcmp.lt.f32.partialorder %v173, 0.0004427343
  %v175 = vsel %vm174, %v172, %v169
  %v176 = vsub.f32 0.0, %v166
  %v177 = vsub.f32 0.0, %v175
  %v178 = vmul.f32 %v13, %v142
  %v179 = vmul.f32 %v14, %v157
  %v180 = vsel %vm43, %v13, %v178
  %v181 = vsel %vm44, %v14, %v179
  %182 = vst [vmem:[%s2] sm:$0xff] %v180
  %183 = vst [vmem:[%s2 + $0x8] sm:$0xff] %v181
  %v184 = vsel %vm43, 0.0, %v176
  %v185 = vsel %vm44, 0.0, %v177
  %v186 = vadd.f32 %v184, %v185
  %187 = vst [vmem:[%s3] sm:$0xff] %v186
  // Predicated region
  $region10: #{elementwise_channel_forward.1} parent=0 // pred_check
    _
  $region11: #{elementwise_channel_forward.1} parent=0 // pred_check_branch
    %189 = sbr.rel (0) target = $region13
  $region12: #{elementwise_channel_forward.1} parent=0 // pred_region
    _
  $region13: #{elementwise_channel_forward.1} parent=0 // pred_fallthru
    _
  // Predicated region
  $region14: #{elementwise_channel_forward.1} parent=0 // pred_check
    _
  $region15: #{elementwise_channel_forward.1} parent=0 // pred_check_branch
    %191 = sbr.rel (0) target = $region17
  $region16: #{elementwise_channel_forward.1} parent=0 // pred_region
    _
  $region17: #{elementwise_channel_forward.1} parent=0 // pred_fallthru
    _
  // Predicated region
  $region18: #{elementwise_channel_forward.1} parent=0 // pred_check
    _
  $region19: #{elementwise_channel_forward.1} parent=0 // pred_check_branch
    %193 = sbr.rel (0) target = $region21
  $region20: #{elementwise_channel_forward.1} parent=0 // pred_region
    _
  $region21: #{elementwise_channel_forward.1} parent=0 // pred_fallthru
    _
  // Predicated region
  $region22: #{elementwise_channel_forward.1} parent=0 // pred_check
    _
  $region23: #{elementwise_channel_forward.1} parent=0 // pred_check_branch
    %195 = sbr.rel (0) target = $region25
  $region24: #{elementwise_channel_forward.1} parent=0 // pred_region
    _
  $region25: #{elementwise_channel_forward.1} parent=0 // pred_fallthru
    _

</llo_original>
